<compile_context>
chip_gen: v7x
topology: tpu7x:2x2x1
jax: 0.10.0
libtpu: 0.0.40
codegen_flags: <defaults>
</compile_context>

<pallas_src>
import re

import jax
import jax.numpy as jnp
from jax.experimental import pallas as pl
from jax.experimental.pallas import tpu as pltpu

_MAX_LANES = 2048            # widest lane tile (f32: 2048 * 4 B = 8 KiB / row)
_SMALL_BYTES = 512 * 1024    # below this: single whole-array block, grid=(1, 1)


# --------------------------------------------------------------------------- #
# Default forward: the identity, implemented as the identity.                 #
# --------------------------------------------------------------------------- #
def parameter_module_forward(x: jax.Array, p: jax.Array) -> jax.Array:
    """Forward of ParameterModule: returns x unchanged (no kernel launch).

    `p` is the module's registered parameter; exactly like the PyTorch module
    it does not participate in forward and is accepted only for API parity.
    """
    del p
    return x


# --------------------------------------------------------------------------- #
# Optional explicit Pallas custom-call path.                                  #
# --------------------------------------------------------------------------- #
def _chip_profile():
    """Best-effort chip detection; conservative defaults if unknown."""
    kind = ""
    try:
        kind = jax.devices()[0].device_kind.lower()
    except Exception:  # defensive: never fail the forward on introspection
        pass
    m = re.search(r"(\d+)", kind)
    ver = int(m.group(1)) if m else 0
    if ver >= 7:
        # v7x: two TensorCores / chip, 64 MiB physical VMEM per TC.
        # 8 MiB in + 8 MiB out, double-buffered = 32 MiB of block buffers.
        return {"tile_bytes": 8 << 20, "vmem_limit": 48 << 20, "num_tc": 2}
    # v5e / v6e: single TensorCore, 128 MiB physical VMEM.
    return {"tile_bytes": 4 << 20, "vmem_limit": 32 << 20, "num_tc": 1}


def _identity_kernel(x_ref, o_ref):
    # The whole forward of ParameterModule: o = x.
    o_ref[...] = x_ref[...]


def _round_up(v, m):
    return ((v + m - 1) // m) * m


def _as_lane_dense_2d(x):
    """Reshape to a (rows, K) slab with K a multiple of 128 whenever possible."""
    total = x.size
    if total % 128 == 0:
        lane_w = next(c for c in (2048, 1024, 512, 256, 128) if total % c == 0)
        return x.reshape(-1, lane_w)
    # TODO(synk): ragged element counts (total % 128 != 0) fall back to the
    # original trailing dim (masked partial stores).  A (k,128)-dense prefix +
    # tiny remainder block would be fully lane-dense, but the default forward
    # path never launches this kernel so the complexity is not warranted.
    if x.ndim >= 2:
        return x.reshape(-1, x.shape[-1])
    return x.reshape(1, total)


def _choose_tiles(R, C, itemsize, prof):
    """Pick (tile_r, tile_c) honoring the (8, 128) rule with a VMEM byte cap."""
    # Lane (column) tile.
    if C <= _MAX_LANES:
        tile_c = C                       # full dim is always legal
    elif C % 128 == 0:
        tile_c = _MAX_LANES
    else:
        tile_c = C                       # ragged wide trailing dim: full width

    # Sublane (row) tile: multiple of 8, byte-capped.
    if R <= 8:
        return R, tile_c
    budget_rows = max(8, ((prof["tile_bytes"] // (tile_c * itemsize)) // 8) * 8)
    tile_r = min(budget_rows, _round_up(R, 8))
    if tile_r >= R:
        tile_r = R                       # whole-array rows: full dim is legal
    # Dual-TC chips (v7x): ensure >= 2 row programs, split BALANCED so both
    # TensorCores get near-equal rows.  Single-TC chips (v5e/v6e) skip this:
    # the extra grid step is pure overhead there.
    if prof["num_tc"] >= 2 and R >= 16 and pl.cdiv(R, tile_r) < 2:
        tile_r = max(8, _round_up(pl.cdiv(R, 2), 8))
    return tile_r, tile_c


def _identity_copy(x, donate_input):
    prof = _chip_profile()
    orig_shape = x.shape
    x2 = _as_lane_dense_2d(x)
    R, C = x2.shape
    itemsize = jnp.dtype(x2.dtype).itemsize
    total_bytes = x2.size * itemsize

    if total_bytes <= _SMALL_BYTES:
        tile_r, tile_c = R, C            # single whole-array (lane-dense) block
    else:
        tile_r, tile_c = _choose_tiles(R, C, itemsize, prof)
    grid = (pl.cdiv(R, tile_r), pl.cdiv(C, tile_c))

    out2 = pl.pallas_call(
        _identity_kernel,
        out_shape=jax.ShapeDtypeStruct((R, C), x2.dtype),
        grid_spec=pl.GridSpec(
            grid=grid,
            in_specs=[pl.BlockSpec((tile_r, tile_c), lambda i, j: (i, j))],
            out_specs=pl.BlockSpec((tile_r, tile_c), lambda i, j: (i, j)),
        ),
        # Alias only when the caller actually donates x (jax.jit donate_argnums);
        # aliasing without donation makes XLA add a defensive full copy of x.
        # NOTE: aliasing is safe only because in/out index_maps are identical.
        input_output_aliases=({0: 0} if donate_input else {}),
        cost_estimate=pl.CostEstimate(
            flops=0, transcendentals=0, bytes_accessed=2 * total_bytes),
        compiler_params=pltpu.CompilerParams(
            dimension_semantics=("parallel", "parallel"),
            vmem_limit_bytes=prof["vmem_limit"],
        ),
    )(x2)
    return out2.reshape(orig_shape)


def parameter_module_forward_pallas(
    x: jax.Array, p: jax.Array, *, donate_input: bool = False
) -> jax.Array:
    """Identity forward expressed as an explicit Pallas custom-call boundary.

    Prefer `parameter_module_forward` (zero-cost).  Use this only when a
    materialized custom-call is required.  Set donate_input=True only if the
    caller donates x (e.g. jax.jit(..., donate_argnums=0)).
    """
    del p
    if x.size == 0:
        return x
    return _identity_copy(x, donate_input)


if __name__ == "__main__":
    key = jax.random.PRNGKey(0)
    kx, kp = jax.random.split(key)

    # Small NCHW activation tensor, consistent with a conv-style input.
    x = jax.random.normal(kx, (2, 4, 16, 16), dtype=jnp.float32)
    # Lone parameter registered by the module (unused in forward).
    p = jax.random.normal(kp, (32,), dtype=jnp.float32)

    # Default (recommended) path: literal pass-through, zero HBM traffic.
    y_fast = parameter_module_forward(x, p)
    assert y_fast is x

    # Explicit Pallas-kernel path: run the kernel once and verify identity.
    y = parameter_module_forward_pallas(x, p)
    y = jax.block_until_ready(y)

    assert y.shape == x.shape and y.dtype == x.dtype
    assert bool(jnp.all(y == x))
    print("KERNEL_OK")
</pallas_src>

<mosaic_0001>
module attributes {stable_mosaic.version = 11 : i64} {
  func.func @_identity_kernel(%arg0: i32, %arg1: i32, %arg2: memref<1x2048xf32, #tpu.memory_space<vmem>>, %arg3: memref<1x2048xf32, #tpu.memory_space<vmem>>) attributes {dimension_semantics = [#tpu.dimension_semantics<parallel>, #tpu.dimension_semantics<parallel>], iteration_bounds = array<i64: 1, 1>, scalar_prefetch = 0 : i64, scratch_operands = 0 : i64, tpu.core_type = #tpu.core_type<tc>, window_params = [{transform_indices = @transform_0, window_bounds = array<i64: 1, 2048>}, {transform_indices = @transform_1, window_bounds = array<i64: 1, 2048>}]} {
    %c0 = arith.constant 0 : index
    %c0_0 = arith.constant 0 : index
    %0 = vector.load %arg2[%c0, %c0_0] : memref<1x2048xf32, #tpu.memory_space<vmem>>, vector<1x2048xf32>
    %c0_1 = arith.constant 0 : index
    %c0_2 = arith.constant 0 : index
    %1 = vector.load %arg3[%c0_1, %c0_2] : memref<1x2048xf32, #tpu.memory_space<vmem>>, vector<1x2048xf32>
    tpu.vector_store %arg3[%c0_1, %c0_2], %0 {strides = array<i32>} : memref<1x2048xf32, #tpu.memory_space<vmem>>, vector<1x2048xf32>,
    return
  }
  func.func @transform_0(%arg0: i32, %arg1: i32) -> (i32, i32) {
    %c0_i32 = arith.constant 0 : i32
    return %arg0, %arg1 : i32, i32
  }
  func.func @transform_1(%arg0: i32, %arg1: i32) -> (i32, i32) {
    %c0_i32 = arith.constant 0 : i32
    return %arg0, %arg1 : i32, i32
  }
}

</mosaic_0001>

<llo_original>
// kernel: tpu_custom_call.1
$region0: #{tpu_custom_call.1}
  #allocation0 [shape = 'u32[]', space=smem, size = 0x4, offset = 0x4, fixed_abs, tag = 'smem constant byte address 0x4 - core index']
  #allocation1 [shape = 'u32[144,128]{1,0:T(1,128)}', space=vmem, size = 0x12000, scoped, tag = 'internal scratch']
  %s0 = inlined_call_operand.hbm [shape: f32[1,2048], index: 0, kind: input, shape index: {}]
  %s1 = inlined_call_operand.hbm [shape: f32[1,2048], index: 1, kind: output, shape index: {}]
  %s2 = sld [smem:[#allocation0]]
  $region18: #{tpu_custom_call.1} parent=0
    _
  %s4 = ssub.s32 1, %s2
  %s5 = scalar_select 0, %s4, %s2
  $region1: #{tpu_custom_call.1} parent=0
    #allocation2 [shape = 'u8[8192]{0}', space=vmem, size = 0x2000, scoped, tag = 'input window, operand 0, single buffered']
    #allocation3 [shape = 's32[1]{0}', space=sflag, size = 0x4, scoped, tag = 'scoped memory for tpu_custom_call.1']
    #allocation4 [shape = 's32[1]{0}', space=sflag, size = 0x4, scoped, tag = 'scoped memory for tpu_custom_call.1']
    #allocation5 [shape = 'u8[8192]{0}', space=vmem, size = 0x2000, scoped, tag = 'output window, operand 0, single buffered']
    %6 = vsyncpa [#allocation3], 0
    %7 = vsyncpa [#allocation4], 0
    // Predicated region
    $region2: #{tpu_custom_call.1} parent=1 // pred_check
      _
    $region3: #{tpu_custom_call.1} parent=1 // pred_check_branch
      %9 = sbr.rel (0) target = $region5
    $region4: #{tpu_custom_call.1} parent=1 // pred_region
      %s11 = ssub.s32 256, 256
      %12 = vsyncadd [#allocation3], %s11
      %s14 = sshll.u32 [#allocation2], 4
      %s15 = int_to_ptr.vmem [resolvable:$true] %s14
      %17 = dma.hbm_to_vmem [thread:$0]  %s0, 256, %s15, [#allocation3]
    $region5: #{tpu_custom_call.1} parent=1 // pred_fallthru
      _
    // Predicated region
    $region6: #{tpu_custom_call.1} parent=1 // pred_check
      _
    $region7: #{tpu_custom_call.1} parent=1 // pred_check_branch
      %19 = sbr.rel (0) target = $region9
    $region8: #{tpu_custom_call.1} parent=1 // pred_region
      %20 = dma.done [#allocation3], 256
    $region9: #{tpu_custom_call.1} parent=1 // pred_fallthru
      _
    %v21 = vld [vmem:[#allocation2] sm:$0xff]
    %v22 = vld [vmem:[#allocation2 + $0x8] sm:$0xff]
    %23 = vst [vmem:[#allocation5] sm:$0xff] %v21
    %24 = vst [vmem:[#allocation5 + $0x8] sm:$0xff] %v22
    // Predicated region
    $region10: #{tpu_custom_call.1} parent=1 // pred_check
      _
    $region11: #{tpu_custom_call.1} parent=1 // pred_check_branch
      %26 = sbr.rel (0) target = $region13
    $region12: #{tpu_custom_call.1} parent=1 // pred_region
      %s28 = ssub.s32 256, 256
      %29 = vsyncadd [#allocation4], %s28
      %s31 = sshll.u32 [#allocation5], 4
      %s32 = int_to_ptr.vmem [resolvable:$true] %s31
      %34 = dma.vmem_to_hbm [thread:$0]  %s32, 256, %s1, [#allocation4]
    $region13: #{tpu_custom_call.1} parent=1 // pred_fallthru
      _
    // Predicated region
    $region14: #{tpu_custom_call.1} parent=1 // pred_check
      _
    $region15: #{tpu_custom_call.1} parent=1 // pred_check_branch
      %36 = sbr.rel (0) target = $region17
    $region16: #{tpu_custom_call.1} parent=1 // pred_region
      %37 = dma.done [#allocation4], 256
    $region17: #{tpu_custom_call.1} parent=1 // pred_fallthru
      _
    %38 = vsyncpa [#allocation3], 1
    %39 = vsyncpa [#allocation4], 1

</llo_original>
